<compile_context>
chip_gen: v7x
topology: tpu7x:2x2x1
jax: 0.10.0
libtpu: 0.0.40
codegen_flags: <defaults>
</compile_context>

<pallas_src>
import functools

import jax
import jax.numpy as jnp
from jax.experimental import pallas as pl
from jax.experimental.pallas import tpu as pltpu

EPS = 1e-5
LANE = 128


def _round_up(v, m):
    return (v + m - 1) // m * m


def _conv_tile(x_ref, w_ref, *, block_l, K):
    """(C_out, C_in*K) @ im2col(halo tile) -> (C_out, block_l) f32."""
    x = x_ref[0, 0]                                    # (C_in, block_l + K - 1)
    # K shifted views of the VMEM-resident halo tile; row order k*C_in + c
    # matches the wrapper's weight reshape.
    patches = jnp.concatenate([x[:, k:k + block_l] for k in range(K)], axis=0)
    return jnp.dot(w_ref[...], patches, preferred_element_type=jnp.float32)


# -----------------------------------------------------------------------------
# Pass 1: conv tile (recomputed later) -> per-channel (sum, sum^2) partials.
# -----------------------------------------------------------------------------
def conv_stats_kernel(x_ref, w_ref, stats_ref, *, block_l, K, l_out):
    y = _conv_tile(x_ref, w_ref, block_l=block_l, K=K)        # (C_out, block_l)
    # Mask lanes past the true L_out (last tile / small-problem padding).
    lane = (pl.program_id(1) * block_l
            + jax.lax.broadcasted_iota(jnp.int32, (1, block_l), 1))
    y = jnp.where(lane < l_out, y, 0.0)
    s1 = jnp.sum(y, axis=1, keepdims=True)                    # (C_out, 1)  XLU
    s2 = jnp.sum(y * y, axis=1, keepdims=True)                # (C_out, 1)
    stats_ref[0, 0, :, 0:1] = s1
    stats_ref[0, 0, :, 1:2] = s2


# -----------------------------------------------------------------------------
# Pass 2: recompute conv, fused per-channel BN FMA + ReLU, NCL-layout store.
# -----------------------------------------------------------------------------
def conv_bn_relu_kernel(x_ref, w_ref, scale_ref, shift_ref, o_ref, *,
                        block_l, K):
    y = _conv_tile(x_ref, w_ref, block_l=block_l, K=K)        # (C_out, block_l)
    z = y * scale_ref[...] + shift_ref[...]                   # (C_out,1) bcast
    o_ref[0] = jnp.maximum(z, 0.0).astype(o_ref.dtype)


def conv_block(x, w, b, gamma, beta, *, compute_dtype=jnp.bfloat16,
               block_l=2048):
    """Conv1d -> BatchNorm1d(train) -> ReLU.  Returns (N, C_out, L_out) f32."""
    del b  # cancelled exactly by BN mean subtraction (training mode)
    N, C_in, L = x.shape
    C_out, _, K = w.shape
    L_out = L - K + 1
    M = N * L_out                        # BN population size per channel
    CK = C_in * K

    # Lane tile: multiple of 128, no larger than the padded output length, and
    # small enough that the grid keeps >= 2 steps (v7x has 2 TensorCores).
    block_l = min(max(LANE, _round_up(block_l, LANE)), _round_up(L_out, LANE))
    while N * pl.cdiv(L_out, block_l) < 2 and block_l > LANE:
        block_l //= 2
    num_l = pl.cdiv(L_out, block_l)
    L_out_pad = num_l * block_l
    halo = block_l + K - 1

    # ---- wrapper-side layout plumbing (once, directly in compute dtype) -----
    # Halo-tiled activations: x_tiles[n, i, c, :] = x_pad[n, c, i*bl : i*bl+halo]
    x_pad = jnp.pad(x.astype(compute_dtype),
                    ((0, 0), (0, 0), (0, L_out_pad + K - 1 - L)))
    col = (jnp.arange(num_l)[:, None] * block_l
           + jnp.arange(halo)[None, :])                        # (num_l, halo)
    x_tiles = jnp.transpose(x_pad[:, :, col], (0, 2, 1, 3))    # (N,num_l,Cin,halo)

    # Weight as (C_out, K*C_in); contraction index k*C_in + c matches the
    # in-kernel patch ordering.
    w_mat = jnp.transpose(w, (0, 2, 1)).reshape(C_out, CK).astype(compute_dtype)

    cparams = pltpu.CompilerParams(
        dimension_semantics=("parallel", "parallel"),
        vmem_limit_bytes=48 * 1024 * 1024,        # fits v7x's 64 MiB VMEM
    )
    flops = 2 * N * L_out_pad * C_out * CK
    x_bytes = x_tiles.size * x_tiles.dtype.itemsize
    w_bytes = w_mat.size * w_mat.dtype.itemsize

    x_spec = pl.BlockSpec((1, 1, C_in, halo), lambda n, i: (n, i, 0, 0))
    w_spec = pl.BlockSpec((C_out, CK), lambda n, i: (0, 0))

    # ---- pass 1: per-tile per-channel (sum, sum^2) partials ------------------
    stats = pl.pallas_call(
        functools.partial(conv_stats_kernel, block_l=block_l, K=K, l_out=L_out),
        grid=(N, num_l),
        in_specs=[x_spec, w_spec],
        out_specs=pl.BlockSpec((1, 1, C_out, 2), lambda n, i: (n, i, 0, 0)),
        out_shape=jax.ShapeDtypeStruct((N, num_l, C_out, 2), jnp.float32),
        compiler_params=cparams,
        cost_estimate=pl.CostEstimate(
            flops=flops, transcendentals=0,
            bytes_accessed=x_bytes + w_bytes + N * num_l * C_out * 2 * 4),
    )(x_tiles, w_mat)

    # ---- fold BN batch stats (+ gamma, beta) into one per-channel FMA --------
    # TODO(synk): E[y^2]-E[y]^2 from f32 partials can cancel if |mean| >> std on
    # real data; switch to a shifted / Welford-style combine if BN stats drift.
    totals = jnp.sum(stats, axis=(0, 1))                   # (C_out, 2), tiny
    mean = totals[:, 0] / M                                # bias-free conv mean
    var = jnp.maximum(totals[:, 1] / M - mean * mean, 0.0)
    scale = gamma.astype(jnp.float32) * jax.lax.rsqrt(var + EPS)
    shift = beta.astype(jnp.float32) - scale * mean
    scale = scale.reshape(C_out, 1)
    shift = shift.reshape(C_out, 1)

    # ---- pass 2: recompute conv, fused BN + ReLU, write NCL directly ---------
    z = pl.pallas_call(
        functools.partial(conv_bn_relu_kernel, block_l=block_l, K=K),
        grid=(N, num_l),
        in_specs=[
            x_spec, w_spec,
            pl.BlockSpec((C_out, 1), lambda n, i: (0, 0)),
            pl.BlockSpec((C_out, 1), lambda n, i: (0, 0)),
        ],
        out_specs=pl.BlockSpec((1, C_out, block_l), lambda n, i: (n, 0, i)),
        out_shape=jax.ShapeDtypeStruct((N, C_out, L_out_pad), jnp.float32),
        compiler_params=cparams,
        cost_estimate=pl.CostEstimate(
            flops=flops, transcendentals=0,
            bytes_accessed=x_bytes + w_bytes + 2 * C_out * 4
                           + N * C_out * L_out_pad * 4),
    )(x_tiles, w_mat, scale, shift)

    # Identity (elided by XLA) whenever L_out is a multiple of block_l.
    return z[:, :, :L_out]


def conv_block_ref(x, w, b, gamma, beta):
    # Pure-JAX reference (matches PyTorch ConvBlock forward in train mode).
    y = jax.lax.conv_general_dilated(
        x, w, window_strides=(1,), padding="VALID",
        dimension_numbers=("NCH", "OIH", "NCH"),
    ) + b[None, :, None]
    mean = jnp.mean(y, axis=(0, 2), keepdims=True)
    var = jnp.mean((y - mean) ** 2, axis=(0, 2), keepdims=True)
    y_hat = (y - mean) / jnp.sqrt(var + EPS)
    return jnp.maximum(gamma[None, :, None] * y_hat + beta[None, :, None], 0.0)


if __name__ == "__main__":
    N, C_in, C_out, L, K = 2, 4, 8, 16, 3

    key = jax.random.PRNGKey(0)
    kx, kw, kb, kg, kbt = jax.random.split(key, 5)
    x = jax.random.normal(kx, (N, C_in, L), jnp.float32)
    w = jax.random.normal(kw, (C_out, C_in, K), jnp.float32) * 0.1
    b = jax.random.normal(kb, (C_out,), jnp.float32) * 0.1
    gamma = 1.0 + 0.1 * jax.random.normal(kg, (C_out,), jnp.float32)
    beta = 0.1 * jax.random.normal(kbt, (C_out,), jnp.float32)

    ref = conv_block_ref(x, w, b, gamma, beta)

    # f32 MXU operands: numerically faithful path, tight tolerance.
    run_f32 = jax.jit(functools.partial(conv_block, compute_dtype=jnp.float32))
    out_f32 = jax.block_until_ready(run_f32(x, w, b, gamma, beta))
    assert out_f32.shape == (N, C_out, L - K + 1)
    assert jnp.max(jnp.abs(out_f32 - ref)) < 1e-4, "f32 path mismatch"

    # bf16 MXU operands (default; v6e/v7x fast path), f32 accumulation + BN.
    run_bf16 = jax.jit(conv_block)
    out_bf16 = jax.block_until_ready(run_bf16(x, w, b, gamma, beta))
    assert out_bf16.shape == (N, C_out, L - K + 1)
    assert jnp.max(jnp.abs(out_bf16 - ref)) < 5e-2, "bf16 path mismatch"

    print("KERNEL_OK")
</pallas_src>

<mosaic_0001>
module attributes {stable_mosaic.version = 11 : i64} {
  func.func @conv_stats_kernel(%arg0: i32, %arg1: i32, %arg2: memref<1x1x4x130xf32, #tpu.memory_space<vmem>>, %arg3: memref<8x12xf32, #tpu.memory_space<vmem>>, %arg4: memref<1x1x8x2xf32, #tpu.memory_space<vmem>>) attributes {dimension_semantics = [#tpu.dimension_semantics<parallel>, #tpu.dimension_semantics<parallel>], iteration_bounds = array<i64: 2, 1>, scalar_prefetch = 0 : i64, scratch_operands = 0 : i64, tpu.core_type = #tpu.core_type<tc>, window_params = [{transform_indices = @transform_0, window_bounds = array<i64: 1, 1, 4, 130>}, {pipeline_mode = #tpu.pipeline_mode<synchronous>, transform_indices = @transform_1, window_bounds = array<i64: 8, 12>}, {transform_indices = @transform_2, window_bounds = array<i64: 1, 1, 8, 2>}]} {
    %c0 = arith.constant 0 : index
    %c0_0 = arith.constant 0 : index
    %c0_1 = arith.constant 0 : index
    %c0_2 = arith.constant 0 : index
    %0 = vector.load %arg2[%c0, %c0_0, %c0_1, %c0_2] : memref<1x1x4x130xf32, #tpu.memory_space<vmem>>, vector<1x1x4x130xf32>
    %1 = vector.shape_cast %0 : vector<1x1x4x130xf32> to vector<4x130xf32>
    %2 = vector.extract_strided_slice %1 {offsets = [0, 0], sizes = [4, 128], strides = [1, 1]} : vector<4x130xf32> to vector<4x128xf32>
    %3 = vector.extract_strided_slice %1 {offsets = [0, 1], sizes = [4, 128], strides = [1, 1]} : vector<4x130xf32> to vector<4x128xf32>
    %4 = vector.extract_strided_slice %1 {offsets = [0, 2], sizes = [4, 128], strides = [1, 1]} : vector<4x130xf32> to vector<4x128xf32>
    %5 = tpu.concatenate %2, %3, %4 in 0 : vector<4x128xf32>, vector<4x128xf32>, vector<4x128xf32> -> vector<12x128xf32>
    %c0_3 = arith.constant 0 : index
    %c0_4 = arith.constant 0 : index
    %6 = vector.load %arg3[%c0_3, %c0_4] : memref<8x12xf32, #tpu.memory_space<vmem>>, vector<8x12xf32>
    %cst = arith.constant dense<0.000000e+00> : vector<8x128xf32>
    %7 = tpu.matmul %6, %5, %cst {dimension_numbers = #tpu.dot_dimension_numbers<[1], [0], [0], [1], [0, 0, 1, 1], [], []>} : vector<8x12xf32>, vector<12x128xf32>, vector<8x128xf32> -> vector<8x128xf32>
    %c128_i32 = arith.constant 128 : i32
    %8 = arith.muli %arg1, %c128_i32 : i32
    %9 = tpu.iota {dimensions = array<i32: 1>} : vector<1x128xi32>
    %10 = vector.broadcast %8 : i32 to vector<1x128xi32>
    %11 = arith.addi %10, %9 : vector<1x128xi32>
    %c14_i32 = arith.constant 14 : i32
    %12 = vector.broadcast %c14_i32 : i32 to vector<1x128xi32>
    %13 = arith.cmpi slt, %11, %12 : vector<1x128xi32>
    %cst_5 = arith.constant 0.000000e+00 : f32
    %14 = vector.shape_cast %13 : vector<1x128xi1> to vector<1x128xi1>
    %15 = vector.broadcast %14 : vector<1x128xi1> to vector<8x128xi1>
    %16 = vector.broadcast %cst_5 : f32 to vector<8x128xf32>
    %17 = arith.select %15, %7, %16 : vector<8x128xi1>, vector<8x128xf32>
    %cst_6 = arith.constant dense<0.000000e+00> : vector<8xf32>
    %18 = vector.multi_reduction <add>, %17, %cst_6 [1] : vector<8x128xf32> to vector<8xf32>
    %19 = vector.shape_cast %18 : vector<8xf32> to vector<8x1xf32>
    %20 = arith.mulf %17, %17 : vector<8x128xf32>
    %cst_7 = arith.constant dense<0.000000e+00> : vector<8xf32>
    %21 = vector.multi_reduction <add>, %20, %cst_7 [1] : vector<8x128xf32> to vector<8xf32>
    %22 = vector.shape_cast %21 : vector<8xf32> to vector<8x1xf32>
    %c0_8 = arith.constant 0 : index
    %c0_9 = arith.constant 0 : index
    %c0_10 = arith.constant 0 : index
    %c0_11 = arith.constant 0 : index
    %23 = vector.load %arg4[%c0_8, %c0_9, %c0_10, %c0_11] : memref<1x1x8x2xf32, #tpu.memory_space<vmem>>, vector<1x1x8x1xf32>
    %24 = vector.shape_cast %23 : vector<1x1x8x1xf32> to vector<8x1xf32>
    %25 = vector.shape_cast %19 : vector<8x1xf32> to vector<1x1x8x1xf32>
    tpu.vector_store %arg4[%c0_8, %c0_9, %c0_10, %c0_11], %25 {strides = array<i32>} : memref<1x1x8x2xf32, #tpu.memory_space<vmem>>, vector<1x1x8x1xf32>,
    %c0_12 = arith.constant 0 : index
    %c0_13 = arith.constant 0 : index
    %c0_14 = arith.constant 0 : index
    %c1 = arith.constant 1 : index
    %26 = vector.load %arg4[%c0_12, %c0_13, %c0_14, %c1] : memref<1x1x8x2xf32, #tpu.memory_space<vmem>>, vector<1x1x8x1xf32>
    %27 = vector.shape_cast %26 : vector<1x1x8x1xf32> to vector<8x1xf32>
    %28 = vector.shape_cast %22 : vector<8x1xf32> to vector<1x1x8x1xf32>
    tpu.vector_store %arg4[%c0_12, %c0_13, %c0_14, %c1], %28 {strides = array<i32>} : memref<1x1x8x2xf32, #tpu.memory_space<vmem>>, vector<1x1x8x1xf32>,
    return
  }
  func.func @transform_0(%arg0: i32, %arg1: i32) -> (i32, i32, i32, i32) {
    %c0_i32 = arith.constant 0 : i32
    %c0_i32_0 = arith.constant 0 : i32
    %c0_i32_1 = arith.constant 0 : i32
    return %arg0, %arg1, %c0_i32, %c0_i32_0 : i32, i32, i32, i32
  }
  func.func @transform_1(%arg0: i32, %arg1: i32) -> (i32, i32) {
    %c0_i32 = arith.constant 0 : i32
    %c0_i32_0 = arith.constant 0 : i32
    %c0_i32_1 = arith.constant 0 : i32
    return %c0_i32, %c0_i32_0 : i32, i32
  }
  func.func @transform_2(%arg0: i32, %arg1: i32) -> (i32, i32, i32, i32) {
    %c0_i32 = arith.constant 0 : i32
    %c0_i32_0 = arith.constant 0 : i32
    %c0_i32_1 = arith.constant 0 : i32
    return %arg0, %arg1, %c0_i32, %c0_i32_0 : i32, i32, i32, i32
  }
}

module attributes {stable_mosaic.version = 11 : i64} {
  func.func @conv_bn_relu_kernel(%arg0: i32, %arg1: i32, %arg2: memref<1x1x4x130xf32, #tpu.memory_space<vmem>>, %arg3: memref<8x12xf32, #tpu.memory_space<vmem>>, %arg4: memref<8x1xf32, #tpu.memory_space<vmem>>, %arg5: memref<8x1xf32, #tpu.memory_space<vmem>>, %arg6: memref<1x8x128xf32, #tpu.memory_space<vmem>>) attributes {dimension_semantics = [#tpu.dimension_semantics<parallel>, #tpu.dimension_semantics<parallel>], iteration_bounds = array<i64: 2, 1>, scalar_prefetch = 0 : i64, scratch_operands = 0 : i64, tpu.core_type = #tpu.core_type<tc>, window_params = [{transform_indices = @transform_0, window_bounds = array<i64: 1, 1, 4, 130>}, {pipeline_mode = #tpu.pipeline_mode<synchronous>, transform_indices = @transform_1, window_bounds = array<i64: 8, 12>}, {pipeline_mode = #tpu.pipeline_mode<synchronous>, transform_indices = @transform_2, window_bounds = array<i64: 8, 1>}, {pipeline_mode = #tpu.pipeline_mode<synchronous>, transform_indices = @transform_3, window_bounds = array<i64: 8, 1>}, {transform_indices = @transform_4, window_bounds = array<i64: 1, 8, 128>}]} {
    %c0 = arith.constant 0 : index
    %c0_0 = arith.constant 0 : index
    %c0_1 = arith.constant 0 : index
    %c0_2 = arith.constant 0 : index
    %0 = vector.load %arg2[%c0, %c0_0, %c0_1, %c0_2] : memref<1x1x4x130xf32, #tpu.memory_space<vmem>>, vector<1x1x4x130xf32>
    %1 = vector.shape_cast %0 : vector<1x1x4x130xf32> to vector<4x130xf32>
    %2 = vector.extract_strided_slice %1 {offsets = [0, 0], sizes = [4, 128], strides = [1, 1]} : vector<4x130xf32> to vector<4x128xf32>
    %3 = vector.extract_strided_slice %1 {offsets = [0, 1], sizes = [4, 128], strides = [1, 1]} : vector<4x130xf32> to vector<4x128xf32>
    %4 = vector.extract_strided_slice %1 {offsets = [0, 2], sizes = [4, 128], strides = [1, 1]} : vector<4x130xf32> to vector<4x128xf32>
    %5 = tpu.concatenate %2, %3, %4 in 0 : vector<4x128xf32>, vector<4x128xf32>, vector<4x128xf32> -> vector<12x128xf32>
    %c0_3 = arith.constant 0 : index
    %c0_4 = arith.constant 0 : index
    %6 = vector.load %arg3[%c0_3, %c0_4] : memref<8x12xf32, #tpu.memory_space<vmem>>, vector<8x12xf32>
    %cst = arith.constant dense<0.000000e+00> : vector<8x128xf32>
    %7 = tpu.matmul %6, %5, %cst {dimension_numbers = #tpu.dot_dimension_numbers<[1], [0], [0], [1], [0, 0, 1, 1], [], []>} : vector<8x12xf32>, vector<12x128xf32>, vector<8x128xf32> -> vector<8x128xf32>
    %c0_5 = arith.constant 0 : index
    %c0_6 = arith.constant 0 : index
    %8 = vector.load %arg4[%c0_5, %c0_6] : memref<8x1xf32, #tpu.memory_space<vmem>>, vector<8x1xf32>
    %9 = vector.broadcast %8 : vector<8x1xf32> to vector<8x128xf32>
    %10 = arith.mulf %7, %9 : vector<8x128xf32>
    %c0_7 = arith.constant 0 : index
    %c0_8 = arith.constant 0 : index
    %11 = vector.load %arg5[%c0_7, %c0_8] : memref<8x1xf32, #tpu.memory_space<vmem>>, vector<8x1xf32>
    %12 = vector.broadcast %11 : vector<8x1xf32> to vector<8x128xf32>
    %13 = arith.addf %10, %12 : vector<8x128xf32>
    %cst_9 = arith.constant 0.000000e+00 : f32
    %14 = vector.broadcast %cst_9 : f32 to vector<8x128xf32>
    %15 = arith.maximumf %13, %14 : vector<8x128xf32>
    %c0_10 = arith.constant 0 : index
    %c0_11 = arith.constant 0 : index
    %c0_12 = arith.constant 0 : index
    %16 = vector.load %arg6[%c0_10, %c0_11, %c0_12] : memref<1x8x128xf32, #tpu.memory_space<vmem>>, vector<1x8x128xf32>
    %17 = vector.shape_cast %16 : vector<1x8x128xf32> to vector<8x128xf32>
    %18 = vector.shape_cast %15 : vector<8x128xf32> to vector<1x8x128xf32>
    tpu.vector_store %arg6[%c0_10, %c0_11, %c0_12], %18 {strides = array<i32>} : memref<1x8x128xf32, #tpu.memory_space<vmem>>, vector<1x8x128xf32>,
    return
  }
  func.func @transform_0(%arg0: i32, %arg1: i32) -> (i32, i32, i32, i32) {
    %c0_i32 = arith.constant 0 : i32
    %c0_i32_0 = arith.constant 0 : i32
    %c0_i32_1 = arith.constant 0 : i32
    return %arg0, %arg1, %c0_i32, %c0_i32_0 : i32, i32, i32, i32
  }
  func.func @transform_1(%arg0: i32, %arg1: i32) -> (i32, i32) {
    %c0_i32 = arith.constant 0 : i32
    %c0_i32_0 = arith.constant 0 : i32
    %c0_i32_1 = arith.constant 0 : i32
    return %c0_i32, %c0_i32_0 : i32, i32
  }
  func.func @transform_2(%arg0: i32, %arg1: i32) -> (i32, i32) {
    %c0_i32 = arith.constant 0 : i32
    %c0_i32_0 = arith.constant 0 : i32
    %c0_i32_1 = arith.constant 0 : i32
    return %c0_i32, %c0_i32_0 : i32, i32
  }
  func.func @transform_3(%arg0: i32, %arg1: i32) -> (i32, i32) {
    %c0_i32 = arith.constant 0 : i32
    %c0_i32_0 = arith.constant 0 : i32
    %c0_i32_1 = arith.constant 0 : i32
    return %c0_i32, %c0_i32_0 : i32, i32
  }
  func.func @transform_4(%arg0: i32, %arg1: i32) -> (i32, i32, i32) {
    %c0_i32 = arith.constant 0 : i32
    %c0_i32_0 = arith.constant 0 : i32
    return %arg0, %c0_i32, %arg1 : i32, i32, i32
  }
}

</mosaic_0001>

<llo_original>
// kernel: conv_block.3
$region0: #{conv_block.3}
  #allocation0 [shape = 'u32[]', space=smem, size = 0x4, offset = 0x4, fixed_abs, tag = 'smem constant byte address 0x4 - core index']
  #allocation1 [shape = 'u32[144,128]{1,0:T(1,128)}', space=vmem, size = 0x12000, scoped, tag = 'internal scratch']
  %s0 = inlined_call_operand.vmem [shape: f32[2,1,4,130], index: 0, kind: input, shape index: {}]
  %s1 = inlined_call_operand.vmem [shape: f32[8,12], index: 1, kind: input, shape index: {}]
  %s2 = inlined_call_operand.vmem [shape: f32[8,1], index: 2, kind: input, shape index: {}]
  %s3 = inlined_call_operand.vmem [shape: f32[8,1], index: 3, kind: input, shape index: {}]
  %s4 = inlined_call_operand.hbm [shape: f32[2,8,128], index: 4, kind: output, shape index: {}]
  %s5 = sld [smem:[#allocation0]]
  $region49: #{conv_block.3} parent=0
    _
  %s7 = ssub.s32 1, %s5
  %s8 = scalar_select 0, %s7, %s5
  $region1: #{conv_block.3} parent=0
    #allocation2 [shape = 'u8[8192]{0}', space=vmem, size = 0x2000, scoped, tag = 'output window, operand 0']
    #allocation3 [shape = 's32[2]{0}', space=sflag, size = 0x8, scoped, tag = 'scoped memory for conv_block.3']
    %9 = vsyncpa [#allocation3], 0
    %s10 = scalar_lea.sflag [#allocation3], 1
    %11 = vsyncpa %s10, 0
    loop: start=0, step=1, limit=4
    $region2: #{conv_block.3} parent=1 // loop_pre_header
      _
    $region3: #{conv_block.3} parent=1 // loop_header
      %s13 = sphi 0, %s17
      %p14 = scmp.ge.s32.totalorder %s13, 4
      %s20 = sphi 0, %s32
      %s21 = sphi 0, %s28
      %s22 = sphi 0, %s20
      %s23 = sphi 0, %s21
      %s24 = sphi 0, %s22
      %s25 = sphi 0, %s23
      %s37 = sphi 0, %s39
      %s40 = sphi 0, %s37
      %s41 = sphi 0, %s40
      %s57 = sphi 0, %s41
      %s61 = sphi 0, %s61
      %s63 = sphi 0, %s61
      %s64 = sphi 0, %s63
      %s78 = sphi 0, %s64
      %s82 = sphi 0, %s82
      %s84 = sphi 0, %s82
      %s85 = sphi 0, %s84
      %s99 = sphi 0, %s85
      %s103 = sphi 0, %s103
      %s105 = sphi 0, %s103
      %s106 = sphi 0, %s105
      %s120 = sphi 0, %s106
      %s128 = sphi 0, %s130
      %s131 = sphi 0, %s128
      %s132 = sphi 0, %s131
      %s148 = sphi 0, %s132
    $region4: #{conv_block.3} parent=1 // loop_header_branch
      %16 = sbr.rel (%p14) target = $region8
    $region5: #{conv_block.3} parent=1 // loop_body
      %s18 = ssub.s32 %s13, 1
      %s19 = ssub.s32 %s13, 2
      %s26 = sadd.s32 1, %s21
      %p27 = scmp.ge.s32.totalorder %s26, 1
      %s28 = scalar_select %p27, 0, %s26
      %s29 = sadd.s32 1, %s20
      %s30 = scalar_select %p27, %s29, %s20
      %p31 = scmp.ge.s32.totalorder %s30, 2
      %s32 = scalar_select %p31, 0, %s30
      %s33 = ssub.s32 %s20, %s32
      %s34 = ssub.s32 %s21, %s28
      %s35 = sor.u32 %s33, %s34
      %p36 = scmp.eq.s32.totalorder %s35, 0
      %s38 = sadd.s32 %s37, 1
      %s39 = scalar_select %p36, %s37, %s38
      %p42 = pneg %p36
      %p43 = scmp.eq.s32.totalorder %s13, 1
      %p44 = por %p42, %p43
      %p45 = scmp.ne.s32.totalorder %s37, %s40
      %p46 = scmp.eq.s32.totalorder %s13, 0
      %p47 = por %p45, %p46
      %p48 = scmp.ne.s32.totalorder %s37, %s40
      %p49 = scmp.eq.s32.totalorder %s18, 1
      %p50 = por %p48, %p49
      %p51 = scmp.ne.s32.totalorder %s40, %s41
      %p52 = scmp.eq.s32.totalorder %s18, 0
      %p53 = por %p51, %p52
      %p54 = scmp.ne.s32.totalorder %s40, %s41
      %p55 = scmp.eq.s32.totalorder %s19, 1
      %p56 = por %p54, %p55
      %p58 = scmp.ne.s32.totalorder %s41, %s57
      %p59 = scmp.eq.s32.totalorder %s19, 0
      %p60 = por %p58, %p59
      %s62 = sadd.s32 %s61, 1
      %p65 = scmp.eq.s32.totalorder %s13, 1
      %p66 = scmp.ne.s32.totalorder %s61, %s63
      %p67 = scmp.eq.s32.totalorder %s13, 0
      %p68 = por %p66, %p67
      %p69 = scmp.ne.s32.totalorder %s61, %s63
      %p70 = scmp.eq.s32.totalorder %s18, 1
      %p71 = por %p69, %p70
      %p72 = scmp.ne.s32.totalorder %s63, %s64
      %p73 = scmp.eq.s32.totalorder %s18, 0
      %p74 = por %p72, %p73
      %p75 = scmp.ne.s32.totalorder %s63, %s64
      %p76 = scmp.eq.s32.totalorder %s19, 1
      %p77 = por %p75, %p76
      %p79 = scmp.ne.s32.totalorder %s64, %s78
      %p80 = scmp.eq.s32.totalorder %s19, 0
      %p81 = por %p79, %p80
      %s83 = sadd.s32 %s82, 1
      %p86 = scmp.eq.s32.totalorder %s13, 1
      %p87 = scmp.ne.s32.totalorder %s82, %s84
      %p88 = scmp.eq.s32.totalorder %s13, 0
      %p89 = por %p87, %p88
      %p90 = scmp.ne.s32.totalorder %s82, %s84
      %p91 = scmp.eq.s32.totalorder %s18, 1
      %p92 = por %p90, %p91
      %p93 = scmp.ne.s32.totalorder %s84, %s85
      %p94 = scmp.eq.s32.totalorder %s18, 0
      %p95 = por %p93, %p94
      %p96 = scmp.ne.s32.totalorder %s84, %s85
      %p97 = scmp.eq.s32.totalorder %s19, 1
      %p98 = por %p96, %p97
      %p100 = scmp.ne.s32.totalorder %s85, %s99
      %p101 = scmp.eq.s32.totalorder %s19, 0
      %p102 = por %p100, %p101
      %s104 = sadd.s32 %s103, 1
      %p107 = scmp.eq.s32.totalorder %s13, 1
      %p108 = scmp.ne.s32.totalorder %s103, %s105
      %p109 = scmp.eq.s32.totalorder %s13, 0
      %p110 = por %p108, %p109
      %p111 = scmp.ne.s32.totalorder %s103, %s105
      %p112 = scmp.eq.s32.totalorder %s18, 1
      %p113 = por %p111, %p112
      %p114 = scmp.ne.s32.totalorder %s105, %s106
      %p115 = scmp.eq.s32.totalorder %s18, 0
      %p116 = por %p114, %p115
      %p117 = scmp.ne.s32.totalorder %s105, %s106
      %p118 = scmp.eq.s32.totalorder %s19, 1
      %p119 = por %p117, %p118
      %p121 = scmp.ne.s32.totalorder %s106, %s120
      %p122 = scmp.eq.s32.totalorder %s19, 0
      %p123 = por %p121, %p122
      %s124 = ssub.s32 %s20, %s32
      %s125 = ssub.s32 %s21, %s28
      %s126 = sor.u32 %s124, %s125
      %p127 = scmp.eq.s32.totalorder %s126, 0
      %s129 = sadd.s32 %s128, 1
      %s130 = scalar_select %p127, %s128, %s129
      %p133 = pneg %p127
      %p134 = scmp.eq.s32.totalorder %s13, 1
      %p135 = por %p133, %p134
      %p136 = scmp.ne.s32.totalorder %s128, %s131
      %p137 = scmp.eq.s32.totalorder %s13, 0
      %p138 = por %p136, %p137
      %p139 = scmp.ne.s32.totalorder %s128, %s131
      %p140 = scmp.eq.s32.totalorder %s18, 1
      %p141 = por %p139, %p140
      %p142 = scmp.ne.s32.totalorder %s131, %s132
      %p143 = scmp.eq.s32.totalorder %s18, 0
      %p144 = por %p142, %p143
      %p145 = scmp.ne.s32.totalorder %s131, %s132
      %p146 = scmp.eq.s32.totalorder %s19, 1
      %p147 = por %p145, %p146
      %p149 = scmp.ne.s32.totalorder %s132, %s148
      %p150 = scmp.eq.s32.totalorder %s19, 0
      %p151 = por %p149, %p150
      %p152 = scmp.le.s32.totalorder 1, %s13
      %p153 = scmp.lt.s32.totalorder %s13, 3
      %p154 = pnand %p152, %p153
      %p155 = pneg %p154
      // Predicated region
      $region9: #{conv_block.3} parent=5 // pred_check
        _
      $region10: #{conv_block.3} parent=5 // pred_check_branch
        %157 = sbr.rel (%p154) target = $region12
      $region11: #{conv_block.3} parent=5 // pred_region
        %s158 = ssub.s32 %s13, 1
        // Predicated region
        $region13: #{conv_block.3} parent=11 // pred_check
          %p159 = pneg %p74
        $region14: #{conv_block.3} parent=11 // pred_check_branch
          %161 = sbr.rel (%p159) target = $region16
        $region15: #{conv_block.3} parent=11 // pred_region
          _
        $region16: #{conv_block.3} parent=11 // pred_fallthru
          _
        // Predicated region
        $region17: #{conv_block.3} parent=11 // pred_check
          %p162 = pneg %p95
        $region18: #{conv_block.3} parent=11 // pred_check_branch
          %164 = sbr.rel (%p162) target = $region20
        $region19: #{conv_block.3} parent=11 // pred_region
          _
        $region20: #{conv_block.3} parent=11 // pred_fallthru
          _
        // Predicated region
        $region21: #{conv_block.3} parent=11 // pred_check
          %p165 = pneg %p116
        $region22: #{conv_block.3} parent=11 // pred_check_branch
          %167 = sbr.rel (%p165) target = $region24
        $region23: #{conv_block.3} parent=11 // pred_region
          _
        $region24: #{conv_block.3} parent=11 // pred_fallthru
          _
      $region12: #{conv_block.3} parent=5 // pred_fallthru
        _
      %p168 = scmp.lt.s32.totalorder %s13, 2
      // Predicated region
      $region25: #{conv_block.3} parent=5 // pred_check
        %p169 = pneg %p168
      $region26: #{conv_block.3} parent=5 // pred_check_branch
        %171 = sbr.rel (%p169) target = $region28
      $region27: #{conv_block.3} parent=5 // pred_region
        // Predicated region
        $region29: #{conv_block.3} parent=27 // pred_check
          %p172 = pneg %p47
        $region30: #{conv_block.3} parent=27 // pred_check_branch
          %174 = sbr.rel (%p172) target = $region32
        $region31: #{conv_block.3} parent=27 // pred_region
          %p175 = scmp.lt.s32.totalorder %s20, 1
          %s176 = scalar_select %p175, %s20, 1
          %p177 = scmp.lt.s32.totalorder %s21, 0
          %s178 = scalar_select %p177, %s21, 0
          %s179 = smul.addr %s178, 2
          %s180 = smul.addr %s176, 2
          %s181 = sadd.s32 %s179, %s180
          %s182 = smul.addr %s181, 4
          %s183 = scalar_lea.vmem %s0, %s182
        $region32: #{conv_block.3} parent=27 // pred_fallthru
          _
      $region28: #{conv_block.3} parent=5 // pred_fallthru
        _
      %p184 = scmp.le.s32.totalorder 1, %s13
      %p185 = scmp.lt.s32.totalorder %s13, 3
      %p186 = pnand %p184, %p185
      %p187 = pneg %p186
      // Predicated region
      $region33: #{conv_block.3} parent=5 // pred_check
        _
      $region34: #{conv_block.3} parent=5 // pred_check_branch
        %189 = sbr.rel (%p186) target = $region36
      $region35: #{conv_block.3} parent=5 // pred_region
        %s190 = ssub.s32 %s13, 1
        %p191 = scmp.lt.s32.totalorder %s22, 1
        %s192 = scalar_select %p191, %s22, 1
        %p193 = scmp.lt.s32.totalorder %s23, 0
        %s194 = scalar_select %p193, %s23, 0
        %s195 = smul.addr %s194, 2
        %s196 = smul.addr %s192, 2
        %s197 = sadd.s32 %s195, %s196
        %s198 = smul.addr %s197, 4
        %s199 = scalar_lea.vmem %s0, %s198
        %p200 = pneg %p53
        %p201 = pneg %p50
        %p202 = pneg %p74
        %p203 = pneg %p71
        %p204 = pneg %p95
        %p205 = pneg %p92
        %p206 = pneg %p116
        %p207 = pneg %p113
        %p208 = pneg %p144
        %p209 = pneg %p141
        %s210 = sand.u32 %s131, 1
        %s211 = scalar_lea.sflag [#allocation3], %s210
        %s212 = sand.u32 %s131, 1
        %s213 = smul.addr %s212, 8
        %s214 = scalar_lea.vmem [#allocation2], %s213
        %p215 = scmp.lt.s32.totalorder %s22, 1
        %s216 = scalar_select %p215, %s22, 1
        %p217 = scmp.lt.s32.totalorder %s23, 0
        %s218 = scalar_select %p217, %s23, 0
        %s219 = smul.addr %s218, 2
        %s220 = smul.addr %s216, 2
        %s221 = sadd.s32 %s219, %s220
        %s222 = smul.addr %s221, 4
        %s223 = scalar_lea.vmem %s0, %s222
        %v224 = vld [vmem:[%s223] sm:$0xff]
        %v226 = vcombine.low %v224, %v224
        %227 = vrot.lane.b32.xlu0 %v226, 127
        %v228 = vpop.permute.xlu0 %227
        %229 = vrot.lane.b32.xlu0 %v224, 127
        %v230 = vpop.permute.xlu0 %229
        %vm231 = vcmask 1039360
        %v232 = vsel %vm231, %v228, %v230
        %v234 = vcombine.high %v224, %v224
        %235 = vrot.lane.b32.xlu0 %v224, 126
        %v236 = vpop.permute.xlu0 %235
        %237 = vrot.lane.b32.xlu0 %v234, 126
        %v238 = vpop.permute.xlu0 %237
        %vm239 = vcmask 1031168
        %v240 = vsel %vm239, %v236, %v238
        %vm241 = vcmask 1043456
        %v242 = vsel %vm241, %v224, %v232
        %v243 = vld [vmem:[%s1] sm:$0xff]
        %vm244 = vcmask 97280
        %v246 = vsel %vm244, %v243, 0
        %v248 = vsel %vm241, %v240, 0
        %250 = vmatprep.subr.mxu0 0.0
        %251 = vmatpush1.msra.mxu0 %v242
        %252 = vmatprep.subr.mxu0 0.0
        %253 = vmatpush1.msra.mxu0 %v248
        %254 = vmatprep.subr.mxu0 0.0
        %255 = vmatpush1.msra.mxu0 0.0
        %256 = vmatprep.subr.mxu0 0.0
        %257 = vmatpush1.msra.mxu0 0.0
        %258 = vmatprep.subr.mxu0 0.0
        %259 = vmatpush1.msra.mxu0 0.0
        %260 = vmatprep.subr.mxu0 0.0
        %261 = vmatpush1.msra.mxu0 0.0
        %262 = vmatprep.subr.mxu0 0.0
        %263 = vmatpush1.msra.mxu0 0.0
        %264 = vmatprep.subr.mxu0 0.0
        %265 = vmatpush1.msra.mxu0 0.0
        %266 = vmatprep.subr.mxu0 0.0
        %267 = vmatpush1.msra.mxu0 0.0
        %268 = vmatprep.subr.mxu0 0.0
        %269 = vmatpush1.msra.mxu0 0.0
        %270 = vmatprep.subr.mxu0 0.0
        %271 = vmatpush1.msra.mxu0 0.0
        %272 = vmatprep.subr.mxu0 0.0
        %273 = vmatpush1.msra.mxu0 0.0
        %274 = vmatprep.subr.mxu0 0.0
        %275 = vmatpush1.msra.mxu0 0.0
        %276 = vmatprep.subr.mxu0 0.0
        %277 = vmatpush1.msra.mxu0 0.0
        %278 = vmatprep.subr.mxu0 0.0
        %279 = vmatpush1.msra.mxu0 0.0
        %280 = vmatprep.subr.mxu0 0.0
        %281 = vmatpush1.msra.mxu0 0.0
        %282 = vmatprep.subr.mxu0 0.0
        %283 = vmatpush1.msra.mxu0 0.0
        %284 = vmatprep.subr.mxu0 0.0
        %285 = vmatpush1.msra.mxu0 0.0
        %286 = vmatprep.subr.mxu0 0.0
        %287 = vmatpush1.msra.mxu0 0.0
        %288 = vmatprep.subr.mxu0 0.0
        %289 = vmatpush1.msra.mxu0 0.0
        %290 = vmatprep.subr.mxu0 0.0
        %291 = vmatpush1.msra.mxu0 0.0
        %292 = vmatprep.subr.mxu0 0.0
        %293 = vmatpush1.msra.mxu0 0.0
        %294 = vmatprep.subr.mxu0 0.0
        %295 = vmatpush1.msra.mxu0 0.0
        %296 = vmatprep.subr.mxu0 0.0
        %297 = vmatpush1.msra.mxu0 0.0
        %298 = vmatprep.subr.mxu0 0.0
        %299 = vmatpush1.msra.mxu0 0.0
        %300 = vmatprep.subr.mxu0 0.0
        %301 = vmatpush1.msra.mxu0 0.0
        %302 = vmatprep.subr.mxu0 0.0
        %303 = vmatpush1.msra.mxu0 0.0
        %304 = vmatprep.subr.mxu0 0.0
        %305 = vmatpush1.msra.mxu0 0.0
        %306 = vmatprep.subr.mxu0 0.0
        %307 = vmatpush1.msra.mxu0 0.0
        %308 = vmatprep.subr.mxu0 0.0
        %309 = vmatpush1.msra.mxu0 0.0
        %310 = vmatprep.subr.mxu0 0.0
        %311 = vmatpush1.msra.mxu0 0.0
        %312 = vmatprep.subr.mxu0 0.0
        %313 = vmatpush1.msra.mxu0 0.0
        %314 = vmatprep.mubr.f32.mxu0 0.0
        %315 = vmatmul.mubr.f32.gmra.mrb[0].mxu0 %v246
        %v316 = vpop.f32.mrb[0].mxu0
        %v317 = vadd.f32 0.0, %v316
        %v318 = vpop.f32.mrb[0].mxu0
        %319 = vdwg.mxu0
        %v320 = vld [vmem:[%s2] sm:$0xff]
        %322 = vset.pattern.permute.xlu0 0
        %323 = vperm.xlu0 %322, %v320
        %v324 = vpop.permute.xlu0 %323
        %v326 = vmul.f32 %v317, %v324
        %v327 = vld [vmem:[%s3] sm:$0xff]
        %329 = vset.pattern.permute.xlu0 0
        %330 = vperm.xlu0 %329, %v327
        %v331 = vpop.permute.xlu0 %330
        %v333 = vadd.f32 %v326, %v331
        %v334 = vmax.f32 %v333, 0.0
        %335 = vst [vmem:[%s214] sm:$0xff] %v334
        %s336 = sand.u32 %s131, 1
        %s337 = scalar_lea.sflag [#allocation3], %s336
        %s338 = sand.u32 %s131, 1
        %s339 = smul.addr %s338, 8
        %s340 = scalar_lea.vmem [#allocation2], %s339
        // Predicated region
        $region37: #{conv_block.3} parent=35 // pred_check
          %p341 = pneg %p141
        $region38: #{conv_block.3} parent=35 // pred_check_branch
          %343 = sbr.rel (%p341) target = $region40
        $region39: #{conv_block.3} parent=35 // pred_region
          %s345 = ssub.s32 128, 128
          %346 = vsyncadd %s337, %s345
          %s347 = sadd.s32 %s23, %s22
          %s348 = smul.addr %s347, 128
          %s349 = scalar_lea.hbm %s4, %s348
          %s351 = sshll.u32 %s340, 4
          %s352 = int_to_ptr.vmem [resolvable:$true] %s351
          %354 = dma.vmem_to_hbm [thread:$0]  %s352, 128, %s349, %s337
        $region40: #{conv_block.3} parent=35 // pred_fallthru
          _
      $region36: #{conv_block.3} parent=5 // pred_fallthru
        _
      %p355 = scmp.le.s32.totalorder 2, %s13
      // Predicated region
      $region41: #{conv_block.3} parent=5 // pred_check
        %p356 = pneg %p355
      $region42: #{conv_block.3} parent=5 // pred_check_branch
        %358 = sbr.rel (%p356) target = $region44
      $region43: #{conv_block.3} parent=5 // pred_region
        %s359 = ssub.s32 %s13, 2
        // Predicated region
        $region45: #{conv_block.3} parent=43 // pred_check
          %p360 = pneg %p147
        $region46: #{conv_block.3} parent=43 // pred_check_branch
          %362 = sbr.rel (%p360) target = $region48
        $region47: #{conv_block.3} parent=43 // pred_region
          %s363 = sand.u32 %s132, 1
          %s364 = scalar_lea.sflag [#allocation3], %s363
          %s365 = sand.u32 %s132, 1
          %s366 = smul.addr %s365, 8
          %s367 = scalar_lea.vmem [#allocation2], %s366
          %368 = dma.done %s364, 128
        $region48: #{conv_block.3} parent=43 // pred_fallthru
          _
      $region44: #{conv_block.3} parent=5 // pred_fallthru
        _
    $region6: #{conv_block.3} parent=1 // loop_footer
      %s17 = sadd.s32 1, %s13
    $region7: #{conv_block.3} parent=1 // loop_footer_branch
      %12 = sbr.rel target = $region3
    $region8: #{conv_block.3} parent=1 // loop_exit
      _
    %369 = vsyncpa [#allocation3], 1
    %s370 = scalar_lea.sflag [#allocation3], 1
    %371 = vsyncpa %s370, 1

// kernel: conv_block.2
$region0: #{conv_block.2}
  #allocation0 [shape = 'u32[]', space=smem, size = 0x4, offset = 0x4, fixed_abs, tag = 'smem constant byte address 0x4 - core index']
  #allocation1 [shape = 'u32[144,128]{1,0:T(1,128)}', space=vmem, size = 0x12000, scoped, tag = 'internal scratch']
  %s0 = inlined_call_operand.vmem [shape: f32[2,1,4,130], index: 0, kind: input, shape index: {}]
  %s1 = inlined_call_operand.vmem [shape: f32[8,12], index: 1, kind: input, shape index: {}]
  %s2 = inlined_call_operand.vmem [shape: f32[2,1,8,2], index: 2, kind: output, shape index: {}]
  %s3 = sld [smem:[#allocation0]]
  $region41: #{conv_block.2} parent=0
    _
  %s5 = ssub.s32 1, %s3
  %s6 = scalar_select 0, %s5, %s3
  loop: start=0, step=1, limit=4
  $region2: #{conv_block.2} parent=0 // loop_pre_header
    _
  $region3: #{conv_block.2} parent=0 // loop_header
    %s8 = sphi 0, %s12
    %p9 = scmp.ge.s32.totalorder %s8, 4
    %s15 = sphi 0, %s27
    %s16 = sphi 0, %s23
    %s17 = sphi 0, %s15
    %s18 = sphi 0, %s16
    %s19 = sphi 0, %s17
    %s20 = sphi 0, %s18
    %s32 = sphi 0, %s34
    %s35 = sphi 0, %s32
    %s36 = sphi 0, %s35
    %s52 = sphi 0, %s36
    %s56 = sphi 0, %s56
    %s58 = sphi 0, %s56
    %s59 = sphi 0, %s58
    %s73 = sphi 0, %s59
    %s81 = sphi 0, %s83
    %s84 = sphi 0, %s81
    %s85 = sphi 0, %s84
    %s101 = sphi 0, %s85
  $region4: #{conv_block.2} parent=0 // loop_header_branch
    %11 = sbr.rel (%p9) target = $region8
  $region5: #{conv_block.2} parent=0 // loop_body
    %s13 = ssub.s32 %s8, 1
    %s14 = ssub.s32 %s8, 2
    %s21 = sadd.s32 1, %s16
    %p22 = scmp.ge.s32.totalorder %s21, 1
    %s23 = scalar_select %p22, 0, %s21
    %s24 = sadd.s32 1, %s15
    %s25 = scalar_select %p22, %s24, %s15
    %p26 = scmp.ge.s32.totalorder %s25, 2
    %s27 = scalar_select %p26, 0, %s25
    %s28 = ssub.s32 %s15, %s27
    %s29 = ssub.s32 %s16, %s23
    %s30 = sor.u32 %s28, %s29
    %p31 = scmp.eq.s32.totalorder %s30, 0
    %s33 = sadd.s32 %s32, 1
    %s34 = scalar_select %p31, %s32, %s33
    %p37 = pneg %p31
    %p38 = scmp.eq.s32.totalorder %s8, 1
    %p39 = por %p37, %p38
    %p40 = scmp.ne.s32.totalorder %s32, %s35
    %p41 = scmp.eq.s32.totalorder %s8, 0
    %p42 = por %p40, %p41
    %p43 = scmp.ne.s32.totalorder %s32, %s35
    %p44 = scmp.eq.s32.totalorder %s13, 1
    %p45 = por %p43, %p44
    %p46 = scmp.ne.s32.totalorder %s35, %s36
    %p47 = scmp.eq.s32.totalorder %s13, 0
    %p48 = por %p46, %p47
    %p49 = scmp.ne.s32.totalorder %s35, %s36
    %p50 = scmp.eq.s32.totalorder %s14, 1
    %p51 = por %p49, %p50
    %p53 = scmp.ne.s32.totalorder %s36, %s52
    %p54 = scmp.eq.s32.totalorder %s14, 0
    %p55 = por %p53, %p54
    %s57 = sadd.s32 %s56, 1
    %p60 = scmp.eq.s32.totalorder %s8, 1
    %p61 = scmp.ne.s32.totalorder %s56, %s58
    %p62 = scmp.eq.s32.totalorder %s8, 0
    %p63 = por %p61, %p62
    %p64 = scmp.ne.s32.totalorder %s56, %s58
    %p65 = scmp.eq.s32.totalorder %s13, 1
    %p66 = por %p64, %p65
    %p67 = scmp.ne.s32.totalorder %s58, %s59
    %p68 = scmp.eq.s32.totalorder %s13, 0
    %p69 = por %p67, %p68
    %p70 = scmp.ne.s32.totalorder %s58, %s59
    %p71 = scmp.eq.s32.totalorder %s14, 1
    %p72 = por %p70, %p71
    %p74 = scmp.ne.s32.totalorder %s59, %s73
    %p75 = scmp.eq.s32.totalorder %s14, 0
    %p76 = por %p74, %p75
    %s77 = ssub.s32 %s15, %s27
    %s78 = ssub.s32 %s16, %s23
    %s79 = sor.u32 %s77, %s78
    %p80 = scmp.eq.s32.totalorder %s79, 0
    %s82 = sadd.s32 %s81, 1
    %s83 = scalar_select %p80, %s81, %s82
    %p86 = pneg %p80
    %p87 = scmp.eq.s32.totalorder %s8, 1
    %p88 = por %p86, %p87
    %p89 = scmp.ne.s32.totalorder %s81, %s84
    %p90 = scmp.eq.s32.totalorder %s8, 0
    %p91 = por %p89, %p90
    %p92 = scmp.ne.s32.totalorder %s81, %s84
    %p93 = scmp.eq.s32.totalorder %s13, 1
    %p94 = por %p92, %p93
    %p95 = scmp.ne.s32.totalorder %s84, %s85
    %p96 = scmp.eq.s32.totalorder %s13, 0
    %p97 = por %p95, %p96
    %p98 = scmp.ne.s32.totalorder %s84, %s85
    %p99 = scmp.eq.s32.totalorder %s14, 1
    %p100 = por %p98, %p99
    %p102 = scmp.ne.s32.totalorder %s85, %s101
    %p103 = scmp.eq.s32.totalorder %s14, 0
    %p104 = por %p102, %p103
    %p105 = scmp.le.s32.totalorder 1, %s8
    %p106 = scmp.lt.s32.totalorder %s8, 3
    %p107 = pnand %p105, %p106
    %p108 = pneg %p107
    // Predicated region
    $region9: #{conv_block.2} parent=5 // pred_check
      _
    $region10: #{conv_block.2} parent=5 // pred_check_branch
      %110 = sbr.rel (%p107) target = $region12
    $region11: #{conv_block.2} parent=5 // pred_region
      %s111 = ssub.s32 %s8, 1
      // Predicated region
      $region13: #{conv_block.2} parent=11 // pred_check
        %p112 = pneg %p69
      $region14: #{conv_block.2} parent=11 // pred_check_branch
        %114 = sbr.rel (%p112) target = $region16
      $region15: #{conv_block.2} parent=11 // pred_region
        _
      $region16: #{conv_block.2} parent=11 // pred_fallthru
        _
    $region12: #{conv_block.2} parent=5 // pred_fallthru
      _
    %p115 = scmp.lt.s32.totalorder %s8, 2
    // Predicated region
    $region17: #{conv_block.2} parent=5 // pred_check
      %p116 = pneg %p115
    $region18: #{conv_block.2} parent=5 // pred_check_branch
      %118 = sbr.rel (%p116) target = $region20
    $region19: #{conv_block.2} parent=5 // pred_region
      // Predicated region
      $region21: #{conv_block.2} parent=19 // pred_check
        %p119 = pneg %p42
      $region22: #{conv_block.2} parent=19 // pred_check_branch
        %121 = sbr.rel (%p119) target = $region24
      $region23: #{conv_block.2} parent=19 // pred_region
        %p122 = scmp.lt.s32.totalorder %s15, 1
        %s123 = scalar_select %p122, %s15, 1
        %p124 = scmp.lt.s32.totalorder %s16, 0
        %s125 = scalar_select %p124, %s16, 0
        %s126 = smul.addr %s125, 2
        %s127 = smul.addr %s123, 2
        %s128 = sadd.s32 %s126, %s127
        %s129 = smul.addr %s128, 4
        %s130 = scalar_lea.vmem %s0, %s129
      $region24: #{conv_block.2} parent=19 // pred_fallthru
        _
    $region20: #{conv_block.2} parent=5 // pred_fallthru
      _
    %p131 = scmp.le.s32.totalorder 1, %s8
    %p132 = scmp.lt.s32.totalorder %s8, 3
    %p133 = pnand %p131, %p132
    %p134 = pneg %p133
    // Predicated region
    $region25: #{conv_block.2} parent=5 // pred_check
      _
    $region26: #{conv_block.2} parent=5 // pred_check_branch
      %136 = sbr.rel (%p133) target = $region28
    $region27: #{conv_block.2} parent=5 // pred_region
      %s137 = ssub.s32 %s8, 1
      %p138 = scmp.lt.s32.totalorder %s17, 1
      %s139 = scalar_select %p138, %s17, 1
      %p140 = scmp.lt.s32.totalorder %s18, 0
      %s141 = scalar_select %p140, %s18, 0
      %s142 = smul.addr %s141, 2
      %s143 = smul.addr %s139, 2
      %s144 = sadd.s32 %s142, %s143
      %s145 = smul.addr %s144, 4
      %s146 = scalar_lea.vmem %s0, %s145
      %p147 = pneg %p48
      %p148 = pneg %p45
      %p149 = pneg %p69
      %p150 = pneg %p66
      %p151 = pneg %p97
      %p152 = pneg %p94
      %p153 = scmp.lt.s32.totalorder %s17, 1
      %s154 = scalar_select %p153, %s17, 1
      %p155 = scmp.lt.s32.totalorder %s18, 0
      %s156 = scalar_select %p155, %s18, 0
      %s157 = sadd.s32 %s156, %s154
      %s158 = smul.addr %s157, 8
      %s159 = scalar_lea.vmem %s2, %s158
      %p160 = scmp.lt.s32.totalorder %s17, 1
      %s161 = scalar_select %p160, %s17, 1
      %p162 = scmp.lt.s32.totalorder %s18, 0
      %s163 = scalar_select %p162, %s18, 0
      %s164 = smul.addr %s163, 2
      %s165 = smul.addr %s161, 2
      %s166 = sadd.s32 %s164, %s165
      %s167 = smul.addr %s166, 4
      %s168 = scalar_lea.vmem %s0, %s167
      %p169 = scmp.lt.s32.totalorder %s17, 1
      %s170 = scalar_select %p169, %s17, 1
      %p171 = scmp.lt.s32.totalorder %s18, 0
      %s172 = scalar_select %p171, %s18, 0
      %s173 = sadd.s32 %s172, %s170
      %s174 = smul.addr %s173, 8
      %s175 = scalar_lea.vmem %s2, %s174
      %v176 = vld [vmem:[%s168] sm:$0xff]
      %v178 = vcombine.low %v176, %v176
      %179 = vrot.lane.b32.xlu0 %v178, 127
      %v180 = vpop.permute.xlu0 %179
      %181 = vrot.lane.b32.xlu0 %v176, 127
      %v182 = vpop.permute.xlu0 %181
      %vm183 = vcmask 1039360
      %v184 = vsel %vm183, %v180, %v182
      %v186 = vcombine.high %v176, %v176
      %187 = vrot.lane.b32.xlu0 %v176, 126
      %v188 = vpop.permute.xlu0 %187
      %189 = vrot.lane.b32.xlu0 %v186, 126
      %v190 = vpop.permute.xlu0 %189
      %vm191 = vcmask 1031168
      %v192 = vsel %vm191, %v188, %v190
      %vm193 = vcmask 1043456
      %v194 = vsel %vm193, %v176, %v184
      %v195 = vld [vmem:[%s1] sm:$0xff]
      %vm196 = vcmask 97280
      %v198 = vsel %vm196, %v195, 0
      %v200 = vsel %vm193, %v192, 0
      %202 = vmatprep.subr.mxu0 0.0
      %203 = vmatpush1.msra.mxu0 %v194
      %204 = vmatprep.subr.mxu0 0.0
      %205 = vmatpush1.msra.mxu0 %v200
      %206 = vmatprep.subr.mxu0 0.0
      %207 = vmatpush1.msra.mxu0 0.0
      %208 = vmatprep.subr.mxu0 0.0
      %209 = vmatpush1.msra.mxu0 0.0
      %210 = vmatprep.subr.mxu0 0.0
      %211 = vmatpush1.msra.mxu0 0.0
      %212 = vmatprep.subr.mxu0 0.0
      %213 = vmatpush1.msra.mxu0 0.0
      %214 = vmatprep.subr.mxu0 0.0
      %215 = vmatpush1.msra.mxu0 0.0
      %216 = vmatprep.subr.mxu0 0.0
      %217 = vmatpush1.msra.mxu0 0.0
      %218 = vmatprep.subr.mxu0 0.0
      %219 = vmatpush1.msra.mxu0 0.0
      %220 = vmatprep.subr.mxu0 0.0
      %221 = vmatpush1.msra.mxu0 0.0
      %222 = vmatprep.subr.mxu0 0.0
      %223 = vmatpush1.msra.mxu0 0.0
      %224 = vmatprep.subr.mxu0 0.0
      %225 = vmatpush1.msra.mxu0 0.0
      %226 = vmatprep.subr.mxu0 0.0
      %227 = vmatpush1.msra.mxu0 0.0
      %228 = vmatprep.subr.mxu0 0.0
      %229 = vmatpush1.msra.mxu0 0.0
      %230 = vmatprep.subr.mxu0 0.0
      %231 = vmatpush1.msra.mxu0 0.0
      %232 = vmatprep.subr.mxu0 0.0
      %233 = vmatpush1.msra.mxu0 0.0
      %234 = vmatprep.subr.mxu0 0.0
      %235 = vmatpush1.msra.mxu0 0.0
      %236 = vmatprep.subr.mxu0 0.0
      %237 = vmatpush1.msra.mxu0 0.0
      %238 = vmatprep.subr.mxu0 0.0
      %239 = vmatpush1.msra.mxu0 0.0
      %240 = vmatprep.subr.mxu0 0.0
      %241 = vmatpush1.msra.mxu0 0.0
      %242 = vmatprep.subr.mxu0 0.0
      %243 = vmatpush1.msra.mxu0 0.0
      %244 = vmatprep.subr.mxu0 0.0
      %245 = vmatpush1.msra.mxu0 0.0
      %246 = vmatprep.subr.mxu0 0.0
      %247 = vmatpush1.msra.mxu0 0.0
      %248 = vmatprep.subr.mxu0 0.0
      %249 = vmatpush1.msra.mxu0 0.0
      %250 = vmatprep.subr.mxu0 0.0
      %251 = vmatpush1.msra.mxu0 0.0
      %252 = vmatprep.subr.mxu0 0.0
      %253 = vmatpush1.msra.mxu0 0.0
      %254 = vmatprep.subr.mxu0 0.0
      %255 = vmatpush1.msra.mxu0 0.0
      %256 = vmatprep.subr.mxu0 0.0
      %257 = vmatpush1.msra.mxu0 0.0
      %258 = vmatprep.subr.mxu0 0.0
      %259 = vmatpush1.msra.mxu0 0.0
      %260 = vmatprep.subr.mxu0 0.0
      %261 = vmatpush1.msra.mxu0 0.0
      %262 = vmatprep.subr.mxu0 0.0
      %263 = vmatpush1.msra.mxu0 0.0
      %264 = vmatprep.subr.mxu0 0.0
      %265 = vmatpush1.msra.mxu0 0.0
      %266 = vmatprep.mubr.f32.mxu0 0.0
      %267 = vmatmul.mubr.f32.gmra.mrb[0].mxu0 %v198
      %v268 = vpop.f32.mrb[0].mxu0
      %v269 = vadd.f32 0.0, %v268
      %v270 = vpop.f32.mrb[0].mxu0
      %271 = vdwg.mxu0
      %s272 = smul.u32 %s18, 128
      %v273 = vlaneseq
      %v274 = vand.u32 %v273, 127
      %v275 = vstv %s272
      %v276 = vadd.s32 %v275, %v274
      %vm277 = vcmp.lt.s32.totalorder %v276, 14
      %v278 = vsel %vm277, 1, 0
      %vm279 = vcmp.eq.s32.totalorder %v278, 1
      %v280 = vsel %vm279, %v269, 0.0
      %281 = vadd.xlane.f32.xlu0 %v280
      %v282 = vpop.xlane.xlu0 %281
      %v283 = vmul.f32 %v280, %v280
      %284 = vadd.xlane.f32.xlu0 %v283
      %v285 = vpop.xlane.xlu0 %284
      %vm286 = vcmask 7168
      %287 = vst.msk [vmem:[%s175] sm:$0xff] %vm286, %v282
      %vm288 = vcmask 15368
      %289 = vst.msk [vmem:[%s175] sm:$0xff] %vm288, %v285
      %p290 = scmp.lt.s32.totalorder %s17, 1
      %s291 = scalar_select %p290, %s17, 1
      %p292 = scmp.lt.s32.totalorder %s18, 0
      %s293 = scalar_select %p292, %s18, 0
      %s294 = sadd.s32 %s293, %s291
      %s295 = smul.addr %s294, 8
      %s296 = scalar_lea.vmem %s2, %s295
      // Predicated region
      $region29: #{conv_block.2} parent=27 // pred_check
        %p297 = pneg %p94
      $region30: #{conv_block.2} parent=27 // pred_check_branch
        %299 = sbr.rel (%p297) target = $region32
      $region31: #{conv_block.2} parent=27 // pred_region
        _
      $region32: #{conv_block.2} parent=27 // pred_fallthru
        _
    $region28: #{conv_block.2} parent=5 // pred_fallthru
      _
    %p300 = scmp.le.s32.totalorder 2, %s8
    // Predicated region
    $region33: #{conv_block.2} parent=5 // pred_check
      %p301 = pneg %p300
    $region34: #{conv_block.2} parent=5 // pred_check_branch
      %303 = sbr.rel (%p301) target = $region36
    $region35: #{conv_block.2} parent=5 // pred_region
      %s304 = ssub.s32 %s8, 2
      // Predicated region
      $region37: #{conv_block.2} parent=35 // pred_check
        %p305 = pneg %p100
      $region38: #{conv_block.2} parent=35 // pred_check_branch
        %307 = sbr.rel (%p305) target = $region40
      $region39: #{conv_block.2} parent=35 // pred_region
        %p308 = scmp.lt.s32.totalorder %s19, 1
        %s309 = scalar_select %p308, %s19, 1
        %p310 = scmp.lt.s32.totalorder %s20, 0
        %s311 = scalar_select %p310, %s20, 0
        %s312 = sadd.s32 %s311, %s309
        %s313 = smul.addr %s312, 8
        %s314 = scalar_lea.vmem %s2, %s313
      $region40: #{conv_block.2} parent=35 // pred_fallthru
        _
    $region36: #{conv_block.2} parent=5 // pred_fallthru
      _
  $region6: #{conv_block.2} parent=0 // loop_footer
    %s12 = sadd.s32 1, %s8
  $region7: #{conv_block.2} parent=0 // loop_footer_branch
    %7 = sbr.rel target = $region3
  $region8: #{conv_block.2} parent=0 // loop_exit
    _

</llo_original>
